<compile_context>
chip_gen: v5e
topology: v5e:2x2
jax: 0.10.0
libtpu: 0.0.40
codegen_flags: <defaults>
</compile_context>

<pallas_src>
import functools
import math

import jax
import jax.numpy as jnp
from jax.experimental import pallas as pl
from jax.experimental.pallas import tpu as pltpu

LANE = 128
SUBLANE = 8


def _round_up(x, m):
    return ((x + m - 1) // m) * m


def _fcnet_kernel(x_ref, w0_ref, b0_ref, wr_ref, br_ref, o_ref, h_ref):
    """Fused FCNet forward for one (tm x P) batch tile.

    Grid axes: 0 = batch tile (parallel), 1 = K tile of layer 0 (arbitrary).
    h_ref accumulates layer-0 partials across K; on the last K step the
    remaining (small, VMEM-resident) layers are applied and o_ref is written.
    """
    k = pl.program_id(1)

    @pl.when(k == 0)
    def _():
        h_ref[...] = jnp.zeros_like(h_ref)

    h_ref[...] += jnp.dot(
        x_ref[...], w0_ref[...], preferred_element_type=jnp.float32
    )

    @pl.when(k == pl.num_programs(1) - 1)
    def _():
        h = jnp.maximum(h_ref[...] + b0_ref[...], 0.0)   # layer 0 epilogue
        # Remaining layers (hidden ... final), all ReLU'd, statically unrolled.
        for l in range(wr_ref.shape[0]):
            h = jnp.maximum(
                jnp.dot(h, wr_ref[l], preferred_element_type=jnp.float32)
                + br_ref[l],
                0.0,
            )
        o_ref[...] = h.astype(o_ref.dtype)


@functools.partial(jax.jit, static_argnames=("classes",))
def _fcnet_forward_padded(x_flat, w0_p, b0_p, wr_p, br_p, *, classes):
    B, K0 = x_flat.shape
    K_pad, P = w0_p.shape

    # Batch (M) tiling: pad to a sublane multiple, cap tile at 256 rows.
    tm = 256 if B > 256 else _round_up(B, SUBLANE)
    M_pad = _round_up(B, tm)
    n_m = M_pad // tm

    # K tiling for the first layer: largest aligned tile dividing K_pad.
    tk = LANE
    for cand in (512, 256, 128):
        if K_pad % cand == 0:
            tk = cand
            break
    n_k = K_pad // tk

    x_p = jnp.zeros((M_pad, K_pad), jnp.float32).at[:B, :K0].set(x_flat)

    out_p = pl.pallas_call(
        _fcnet_kernel,
        out_shape=jax.ShapeDtypeStruct((M_pad, P), jnp.float32),
        grid_spec=pltpu.PrefetchScalarGridSpec(
            num_scalar_prefetch=0,
            grid=(n_m, n_k),
            in_specs=[
                pl.BlockSpec((tm, tk), lambda i, k: (i, k)),        # x tile
                pl.BlockSpec((tk, P), lambda i, k: (k, 0)),         # w0 K-tile
                pl.BlockSpec((1, P), lambda i, k: (0, 0)),          # b0
                pl.BlockSpec(wr_p.shape, lambda i, k: (0, 0, 0)),   # rest W
                pl.BlockSpec(br_p.shape, lambda i, k: (0, 0, 0)),   # rest b
            ],
            out_specs=pl.BlockSpec((tm, P), lambda i, k: (i, 0)),
            scratch_shapes=[pltpu.VMEM((tm, P), jnp.float32)],
        ),
        compiler_params=pltpu.CompilerParams(
            dimension_semantics=("parallel", "arbitrary"),
            vmem_limit_bytes=32 * 1024 * 1024,   # safe on v5e/v6e/v7x; usage ~2 MiB
        ),
    )(x_p, w0_p, b0_p, wr_p, br_p)

    return out_p[:B, :classes]


def init_fcnet_params(key, input_size, channels, num_layers, layer_size, classes):
    """Deterministic PyTorch-Linear-style init (uniform +-1/sqrt(fan_in)).

    Returns a list of (W, b) with W in the PyTorch (out_features, in_features)
    layout, matching nn.Linear.
    """
    dims = [input_size ** 2 * channels] + [layer_size] * num_layers + [classes]
    params = []
    for i in range(len(dims) - 1):
        fan_in, fan_out = dims[i], dims[i + 1]
        key, kw, kb = jax.random.split(key, 3)
        bound = 1.0 / math.sqrt(fan_in)
        w = jax.random.uniform(
            kw, (fan_out, fan_in), jnp.float32, minval=-bound, maxval=bound
        )
        b = jax.random.uniform(
            kb, (fan_out,), jnp.float32, minval=-bound, maxval=bound
        )
        params.append((w, b))
    return params


def prepare_fcnet_params(params):
    """One-time prep: transpose to (in, out), zero-pad all widths to a common
    lane-dense multiple of 128, and stack layers 1..L-1 into one VMEM slab."""
    assert len(params) >= 2
    K0 = params[0][0].shape[1]
    out_dims = [w.shape[0] for w, _ in params]
    P = _round_up(max(out_dims), LANE)
    K_pad = _round_up(K0, LANE)

    w0, b0 = params[0]
    h0 = w0.shape[0]
    w0_p = jnp.zeros((K_pad, P), jnp.float32).at[:K0, :h0].set(w0.T)
    b0_p = jnp.zeros((1, P), jnp.float32).at[0, :h0].set(b0)

    n_rest = len(params) - 1
    wr = jnp.zeros((n_rest, P, P), jnp.float32)
    br = jnp.zeros((n_rest, 1, P), jnp.float32)
    for l, (w, b) in enumerate(params[1:]):
        o, i = w.shape
        wr = wr.at[l, :i, :o].set(w.T)
        br = br.at[l, 0, :o].set(b)

    return {
        "w0": w0_p,
        "b0": b0_p,
        "wr": wr,
        "br": br,
        "classes": int(params[-1][0].shape[0]),
    }


def fcnet_forward(x_nchw, prepared):
    """Forward pass of FCNet. x_nchw: (B, C, H, W)."""
    B = x_nchw.shape[0]
    x_flat = x_nchw.reshape(B, -1).astype(jnp.float32)  # matches torch .view(B,-1)
    return _fcnet_forward_padded(
        x_flat,
        prepared["w0"],
        prepared["b0"],
        prepared["wr"],
        prepared["br"],
        classes=prepared["classes"],
    )


def fcnet_reference(x_nchw, params):
    """Pure-JAX reference for correctness check."""
    B = x_nchw.shape[0]
    x = x_nchw.reshape(B, -1)
    for w, b in params:
        x = jnp.maximum(x @ w.T + b, 0.0)
    return x


if __name__ == "__main__":
    # Config consistent with the module: input_size=16, channels=4,
    # num_layers=3, layer_size=32, classes=10, batch=2.
    input_size = 16
    channels = 4
    num_layers = 3
    layer_size = 32
    classes = 10
    batch = 2

    key = jax.random.PRNGKey(0)
    k_x, k_p = jax.random.split(key)
    x = jax.random.normal(
        k_x, (batch, channels, input_size, input_size), jnp.float32
    )
    params = init_fcnet_params(
        k_p, input_size, channels, num_layers, layer_size, classes
    )
    prepared = prepare_fcnet_params(params)

    out = jax.block_until_ready(fcnet_forward(x, prepared))
    ref = fcnet_reference(x, params)

    assert out.shape == (batch, classes), out.shape
    assert jnp.allclose(out, ref, atol=1e-4, rtol=1e-4), "mismatch vs reference"

    print("KERNEL_OK")
</pallas_src>

<mosaic_0001>
module attributes {stable_mosaic.version = 11 : i64} {
  func.func @_fcnet_kernel(%arg0: i32, %arg1: i32, %arg2: memref<8x512xf32, #tpu.memory_space<vmem>>, %arg3: memref<512x128xf32, #tpu.memory_space<vmem>>, %arg4: memref<1x128xf32, #tpu.memory_space<vmem>>, %arg5: memref<3x128x128xf32, #tpu.memory_space<vmem>>, %arg6: memref<3x1x128xf32, #tpu.memory_space<vmem>>, %arg7: memref<8x128xf32, #tpu.memory_space<vmem>>, %arg8: memref<8x128xf32, #tpu.memory_space<vmem>>) attributes {dimension_semantics = [#tpu.dimension_semantics<parallel>, #tpu.dimension_semantics<arbitrary>], iteration_bounds = array<i64: 1, 2>, scalar_prefetch = 0 : i64, scratch_operands = 1 : i64, tpu.core_type = #tpu.core_type<tc>, window_params = [{transform_indices = @transform_0, window_bounds = array<i64: 8, 512>}, {transform_indices = @transform_1, window_bounds = array<i64: 512, 128>}, {pipeline_mode = #tpu.pipeline_mode<synchronous>, transform_indices = @transform_2, window_bounds = array<i64: 1, 128>}, {pipeline_mode = #tpu.pipeline_mode<synchronous>, transform_indices = @transform_3, window_bounds = array<i64: 3, 128, 128>}, {pipeline_mode = #tpu.pipeline_mode<synchronous>, transform_indices = @transform_4, window_bounds = array<i64: 3, 1, 128>}, {transform_indices = @transform_5, window_bounds = array<i64: 8, 128>}]} {
    %c0_i32 = arith.constant 0 : i32
    %0 = arith.cmpi eq, %arg1, %c0_i32 : i32
    %1 = arith.extui %0 : i1 to i32
    %c0_i32_0 = arith.constant 0 : i32
    %2 = arith.cmpi ne, %1, %c0_i32_0 : i32
    scf.if %2 {
      %cst_9 = arith.constant 0.000000e+00 : f32
      %12 = vector.broadcast %cst_9 : f32 to vector<8x128xf32>
      %c0_10 = arith.constant 0 : index
      %c0_11 = arith.constant 0 : index
      %13 = vector.load %arg8[%c0_10, %c0_11] : memref<8x128xf32, #tpu.memory_space<vmem>>, vector<8x128xf32>
      tpu.vector_store %arg8[%c0_10, %c0_11], %12 {strides = array<i32>} : memref<8x128xf32, #tpu.memory_space<vmem>>, vector<8x128xf32>,
    } else {
    }
    %c0 = arith.constant 0 : index
    %c0_1 = arith.constant 0 : index
    %3 = vector.load %arg8[%c0, %c0_1] : memref<8x128xf32, #tpu.memory_space<vmem>>, vector<8x128xf32>
    %c0_2 = arith.constant 0 : index
    %c0_3 = arith.constant 0 : index
    %4 = vector.load %arg2[%c0_2, %c0_3] : memref<8x512xf32, #tpu.memory_space<vmem>>, vector<8x512xf32>
    %c0_4 = arith.constant 0 : index
    %c0_5 = arith.constant 0 : index
    %5 = vector.load %arg3[%c0_4, %c0_5] : memref<512x128xf32, #tpu.memory_space<vmem>>, vector<512x128xf32>
    %cst = arith.constant dense<0.000000e+00> : vector<8x128xf32>
    %6 = tpu.matmul %4, %5, %cst {dimension_numbers = #tpu.dot_dimension_numbers<[1], [0], [0], [1], [0, 0, 1, 1], [], []>} : vector<8x512xf32>, vector<512x128xf32>, vector<8x128xf32> -> vector<8x128xf32>
    %7 = arith.addf %3, %6 : vector<8x128xf32>
    %c0_6 = arith.constant 0 : index
    %c0_7 = arith.constant 0 : index
    %8 = vector.load %arg8[%c0_6, %c0_7] : memref<8x128xf32, #tpu.memory_space<vmem>>, vector<8x128xf32>
    tpu.vector_store %arg8[%c0_6, %c0_7], %7 {strides = array<i32>} : memref<8x128xf32, #tpu.memory_space<vmem>>, vector<8x128xf32>,
    %c1_i32 = arith.constant 1 : i32
    %9 = arith.cmpi eq, %arg1, %c1_i32 : i32
    %10 = arith.extui %9 : i1 to i32
    %c0_i32_8 = arith.constant 0 : i32
    %11 = arith.cmpi ne, %10, %c0_i32_8 : i32
    scf.if %11 {
      %c0_9 = arith.constant 0 : index
      %c0_10 = arith.constant 0 : index
      %12 = vector.load %arg8[%c0_9, %c0_10] : memref<8x128xf32, #tpu.memory_space<vmem>>, vector<8x128xf32>
      %c0_11 = arith.constant 0 : index
      %c0_12 = arith.constant 0 : index
      %13 = vector.load %arg4[%c0_11, %c0_12] : memref<1x128xf32, #tpu.memory_space<vmem>>, vector<1x128xf32>
      %14 = vector.broadcast %13 : vector<1x128xf32> to vector<8x128xf32>
      %15 = arith.addf %12, %14 : vector<8x128xf32>
      %cst_13 = arith.constant 0.000000e+00 : f32
      %16 = vector.broadcast %cst_13 : f32 to vector<8x128xf32>
      %17 = arith.maximumf %15, %16 : vector<8x128xf32>
      %c0_14 = arith.constant 0 : index
      %c0_15 = arith.constant 0 : index
      %c0_16 = arith.constant 0 : index
      %18 = vector.load %arg5[%c0_14, %c0_15, %c0_16] : memref<3x128x128xf32, #tpu.memory_space<vmem>>, vector<1x128x128xf32>
      %19 = vector.shape_cast %18 : vector<1x128x128xf32> to vector<128x128xf32>
      %cst_17 = arith.constant dense<0.000000e+00> : vector<8x128xf32>
      %20 = tpu.matmul %17, %19, %cst_17 {dimension_numbers = #tpu.dot_dimension_numbers<[1], [0], [0], [1], [0, 0, 1, 1], [], []>} : vector<8x128xf32>, vector<128x128xf32>, vector<8x128xf32> -> vector<8x128xf32>
      %c0_18 = arith.constant 0 : index
      %c0_19 = arith.constant 0 : index
      %c0_20 = arith.constant 0 : index
      %21 = vector.load %arg6[%c0_18, %c0_19, %c0_20] : memref<3x1x128xf32, #tpu.memory_space<vmem>>, vector<1x1x128xf32>
      %22 = vector.shape_cast %21 : vector<1x1x128xf32> to vector<1x128xf32>
      %23 = vector.broadcast %22 : vector<1x128xf32> to vector<8x128xf32>
      %24 = arith.addf %20, %23 : vector<8x128xf32>
      %cst_21 = arith.constant 0.000000e+00 : f32
      %25 = vector.broadcast %cst_21 : f32 to vector<8x128xf32>
      %26 = arith.maximumf %24, %25 : vector<8x128xf32>
      %c1 = arith.constant 1 : index
      %c0_22 = arith.constant 0 : index
      %c0_23 = arith.constant 0 : index
      %27 = vector.load %arg5[%c1, %c0_22, %c0_23] : memref<3x128x128xf32, #tpu.memory_space<vmem>>, vector<1x128x128xf32>
      %28 = vector.shape_cast %27 : vector<1x128x128xf32> to vector<128x128xf32>
      %cst_24 = arith.constant dense<0.000000e+00> : vector<8x128xf32>
      %29 = tpu.matmul %26, %28, %cst_24 {dimension_numbers = #tpu.dot_dimension_numbers<[1], [0], [0], [1], [0, 0, 1, 1], [], []>} : vector<8x128xf32>, vector<128x128xf32>, vector<8x128xf32> -> vector<8x128xf32>
      %c1_25 = arith.constant 1 : index
      %c0_26 = arith.constant 0 : index
      %c0_27 = arith.constant 0 : index
      %30 = vector.load %arg6[%c1_25, %c0_26, %c0_27] : memref<3x1x128xf32, #tpu.memory_space<vmem>>, vector<1x1x128xf32>
      %31 = vector.shape_cast %30 : vector<1x1x128xf32> to vector<1x128xf32>
      %32 = vector.broadcast %31 : vector<1x128xf32> to vector<8x128xf32>
      %33 = arith.addf %29, %32 : vector<8x128xf32>
      %cst_28 = arith.constant 0.000000e+00 : f32
      %34 = vector.broadcast %cst_28 : f32 to vector<8x128xf32>
      %35 = arith.maximumf %33, %34 : vector<8x128xf32>
      %c2 = arith.constant 2 : index
      %c0_29 = arith.constant 0 : index
      %c0_30 = arith.constant 0 : index
      %36 = vector.load %arg5[%c2, %c0_29, %c0_30] : memref<3x128x128xf32, #tpu.memory_space<vmem>>, vector<1x128x128xf32>
      %37 = vector.shape_cast %36 : vector<1x128x128xf32> to vector<128x128xf32>
      %cst_31 = arith.constant dense<0.000000e+00> : vector<8x128xf32>
      %38 = tpu.matmul %35, %37, %cst_31 {dimension_numbers = #tpu.dot_dimension_numbers<[1], [0], [0], [1], [0, 0, 1, 1], [], []>} : vector<8x128xf32>, vector<128x128xf32>, vector<8x128xf32> -> vector<8x128xf32>
      %c2_32 = arith.constant 2 : index
      %c0_33 = arith.constant 0 : index
      %c0_34 = arith.constant 0 : index
      %39 = vector.load %arg6[%c2_32, %c0_33, %c0_34] : memref<3x1x128xf32, #tpu.memory_space<vmem>>, vector<1x1x128xf32>
      %40 = vector.shape_cast %39 : vector<1x1x128xf32> to vector<1x128xf32>
      %41 = vector.broadcast %40 : vector<1x128xf32> to vector<8x128xf32>
      %42 = arith.addf %38, %41 : vector<8x128xf32>
      %cst_35 = arith.constant 0.000000e+00 : f32
      %43 = vector.broadcast %cst_35 : f32 to vector<8x128xf32>
      %44 = arith.maximumf %42, %43 : vector<8x128xf32>
      %c0_36 = arith.constant 0 : index
      %c0_37 = arith.constant 0 : index
      %45 = vector.load %arg7[%c0_36, %c0_37] : memref<8x128xf32, #tpu.memory_space<vmem>>, vector<8x128xf32>
      tpu.vector_store %arg7[%c0_36, %c0_37], %44 {strides = array<i32>} : memref<8x128xf32, #tpu.memory_space<vmem>>, vector<8x128xf32>,
    } else {
    }
    return
  }
  func.func @transform_0(%arg0: i32, %arg1: i32) -> (i32, i32) {
    %c0_i32 = arith.constant 0 : i32
    return %arg0, %arg1 : i32, i32
  }
  func.func @transform_1(%arg0: i32, %arg1: i32) -> (i32, i32) {
    %c0_i32 = arith.constant 0 : i32
    %c0_i32_0 = arith.constant 0 : i32
    return %arg1, %c0_i32 : i32, i32
  }
  func.func @transform_2(%arg0: i32, %arg1: i32) -> (i32, i32) {
    %c0_i32 = arith.constant 0 : i32
    %c0_i32_0 = arith.constant 0 : i32
    %c0_i32_1 = arith.constant 0 : i32
    return %c0_i32, %c0_i32_0 : i32, i32
  }
  func.func @transform_3(%arg0: i32, %arg1: i32) -> (i32, i32, i32) {
    %c0_i32 = arith.constant 0 : i32
    %c0_i32_0 = arith.constant 0 : i32
    %c0_i32_1 = arith.constant 0 : i32
    %c0_i32_2 = arith.constant 0 : i32
    return %c0_i32, %c0_i32_0, %c0_i32_1 : i32, i32, i32
  }
  func.func @transform_4(%arg0: i32, %arg1: i32) -> (i32, i32, i32) {
    %c0_i32 = arith.constant 0 : i32
    %c0_i32_0 = arith.constant 0 : i32
    %c0_i32_1 = arith.constant 0 : i32
    %c0_i32_2 = arith.constant 0 : i32
    return %c0_i32, %c0_i32_0, %c0_i32_1 : i32, i32, i32
  }
  func.func @transform_5(%arg0: i32, %arg1: i32) -> (i32, i32) {
    %c0_i32 = arith.constant 0 : i32
    %c0_i32_0 = arith.constant 0 : i32
    return %arg0, %c0_i32 : i32, i32
  }
}

</mosaic_0001>

<llo_original>
// kernel: _fcnet_forward_padded.1
$region0: #{_fcnet_forward_padded.1}
  #allocation0 [shape = 'u32[]', space=smem, size = 0x4, offset = 0x4, fixed_abs, tag = 'smem constant byte address 0x4 - core index']
  #allocation1 [shape = 'u32[72,128]{1,0:T(1,128)}', space=vmem, size = 0x9000, scoped, tag = 'internal scratch']
  #allocation2 [shape = 'f32[8,128]{1,0:T(8,128)}', space=vmem, size = 0x1000, scoped, tag = 'scratch operand']
  %s0 = inlined_call_operand.vmem [shape: f32[8,1024], index: 0, kind: input, shape index: {}]
  %s1 = inlined_call_operand.hbm [shape: f32[1024,128], index: 1, kind: input, shape index: {}]
  %s2 = inlined_call_operand.vmem [shape: f32[1,128], index: 2, kind: input, shape index: {}]
  %s3 = inlined_call_operand.hbm [shape: f32[3,128,128], index: 3, kind: input, shape index: {}]
  %s4 = inlined_call_operand.vmem [shape: f32[3,1,128], index: 4, kind: input, shape index: {}]
  %s5 = inlined_call_operand.vmem [shape: f32[8,128], index: 5, kind: output, shape index: {}]
  %s6 = sld [smem:[#allocation0]]
  $region69: #{_fcnet_forward_padded.1} parent=0
    _
  %s8 = ssub.s32 1, %s6
  %s9 = scalar_select 0, %s8, %s6
  $region1: #{_fcnet_forward_padded.1} parent=0
    #allocation3 [shape = 'u8[524288]{0}', space=vmem, size = 0x80000, scoped, tag = 'input window, operand 1']
    #allocation4 [shape = 's32[2]{0}', space=sflag, size = 0x8, scoped, tag = 'scoped memory for _fcnet_forward_padded.1']
    #allocation5 [shape = 'u8[196608]{0}', space=vmem, size = 0x30000, scoped, tag = 'input window, operand 3, single buffered']
    #allocation6 [shape = 's32[1]{0}', space=sflag, size = 0x4, scoped, tag = 'scoped memory for _fcnet_forward_padded.1']
    %10 = vsyncpa [#allocation4], 0
    %s11 = scalar_lea.sflag [#allocation4], 1
    %12 = vsyncpa %s11, 0
    %13 = vsyncpa [#allocation6], 0
    loop: start=0, step=1, limit=4
    $region2: #{_fcnet_forward_padded.1} parent=1 // loop_pre_header
      _
    $region3: #{_fcnet_forward_padded.1} parent=1 // loop_header
      %s15 = sphi 0, %s19
      %p16 = scmp.ge.s32.totalorder %s15, 4
      %s22 = sphi 0, %s34
      %s23 = sphi 0, %s30
      %s24 = sphi 0, %s22
      %s25 = sphi 0, %s23
      %s26 = sphi 0, %s24
      %s27 = sphi 0, %s25
      %s39 = sphi 0, %s41
      %s42 = sphi 0, %s39
      %s43 = sphi 0, %s42
      %s59 = sphi 0, %s43
      %s65 = sphi 0, %s67
      %s68 = sphi 0, %s65
      %s69 = sphi 0, %s68
      %s85 = sphi 0, %s69
      %s89 = sphi 0, %s89
      %s91 = sphi 0, %s89
      %s92 = sphi 0, %s91
      %s106 = sphi 0, %s92
      %s110 = sphi 0, %s110
      %s112 = sphi 0, %s110
      %s113 = sphi 0, %s112
      %s127 = sphi 0, %s113
      %s131 = sphi 0, %s131
      %s133 = sphi 0, %s131
      %s134 = sphi 0, %s133
      %s148 = sphi 0, %s134
      %s154 = sphi 0, %s156
      %s157 = sphi 0, %s154
      %s158 = sphi 0, %s157
      %s174 = sphi 0, %s158
    $region4: #{_fcnet_forward_padded.1} parent=1 // loop_header_branch
      %18 = sbr.rel (%p16) target = $region8
    $region5: #{_fcnet_forward_padded.1} parent=1 // loop_body
      %s20 = ssub.s32 %s15, 1
      %s21 = ssub.s32 %s15, 2
      %s28 = sadd.s32 1, %s23
      %p29 = scmp.ge.s32.totalorder %s28, 2
      %s30 = scalar_select %p29, 0, %s28
      %s31 = sadd.s32 1, %s22
      %s32 = scalar_select %p29, %s31, %s22
      %p33 = scmp.ge.s32.totalorder %s32, 1
      %s34 = scalar_select %p33, 0, %s32
      %s35 = ssub.s32 %s22, %s34
      %s36 = ssub.s32 %s23, %s30
      %s37 = sor.u32 %s35, %s36
      %p38 = scmp.eq.s32.totalorder %s37, 0
      %s40 = sadd.s32 %s39, 1
      %s41 = scalar_select %p38, %s39, %s40
      %p44 = pneg %p38
      %p45 = scmp.eq.s32.totalorder %s15, 1
      %p46 = por %p44, %p45
      %p47 = scmp.ne.s32.totalorder %s39, %s42
      %p48 = scmp.eq.s32.totalorder %s15, 0
      %p49 = por %p47, %p48
      %p50 = scmp.ne.s32.totalorder %s39, %s42
      %p51 = scmp.eq.s32.totalorder %s20, 1
      %p52 = por %p50, %p51
      %p53 = scmp.ne.s32.totalorder %s42, %s43
      %p54 = scmp.eq.s32.totalorder %s20, 0
      %p55 = por %p53, %p54
      %p56 = scmp.ne.s32.totalorder %s42, %s43
      %p57 = scmp.eq.s32.totalorder %s21, 1
      %p58 = por %p56, %p57
      %p60 = scmp.ne.s32.totalorder %s43, %s59
      %p61 = scmp.eq.s32.totalorder %s21, 0
      %p62 = por %p60, %p61
      %s63 = ssub.s32 %s23, %s30
      %p64 = scmp.eq.s32.totalorder %s63, 0
      %s66 = sadd.s32 %s65, 1
      %s67 = scalar_select %p64, %s65, %s66
      %p70 = pneg %p64
      %p71 = scmp.eq.s32.totalorder %s15, 1
      %p72 = por %p70, %p71
      %p73 = scmp.ne.s32.totalorder %s65, %s68
      %p74 = scmp.eq.s32.totalorder %s15, 0
      %p75 = por %p73, %p74
      %p76 = scmp.ne.s32.totalorder %s65, %s68
      %p77 = scmp.eq.s32.totalorder %s20, 1
      %p78 = por %p76, %p77
      %p79 = scmp.ne.s32.totalorder %s68, %s69
      %p80 = scmp.eq.s32.totalorder %s20, 0
      %p81 = por %p79, %p80
      %p82 = scmp.ne.s32.totalorder %s68, %s69
      %p83 = scmp.eq.s32.totalorder %s21, 1
      %p84 = por %p82, %p83
      %p86 = scmp.ne.s32.totalorder %s69, %s85
      %p87 = scmp.eq.s32.totalorder %s21, 0
      %p88 = por %p86, %p87
      %s90 = sadd.s32 %s89, 1
      %p93 = scmp.eq.s32.totalorder %s15, 1
      %p94 = scmp.ne.s32.totalorder %s89, %s91
      %p95 = scmp.eq.s32.totalorder %s15, 0
      %p96 = por %p94, %p95
      %p97 = scmp.ne.s32.totalorder %s89, %s91
      %p98 = scmp.eq.s32.totalorder %s20, 1
      %p99 = por %p97, %p98
      %p100 = scmp.ne.s32.totalorder %s91, %s92
      %p101 = scmp.eq.s32.totalorder %s20, 0
      %p102 = por %p100, %p101
      %p103 = scmp.ne.s32.totalorder %s91, %s92
      %p104 = scmp.eq.s32.totalorder %s21, 1
      %p105 = por %p103, %p104
      %p107 = scmp.ne.s32.totalorder %s92, %s106
      %p108 = scmp.eq.s32.totalorder %s21, 0
      %p109 = por %p107, %p108
      %s111 = sadd.s32 %s110, 1
      %p114 = scmp.eq.s32.totalorder %s15, 1
      %p115 = scmp.ne.s32.totalorder %s110, %s112
      %p116 = scmp.eq.s32.totalorder %s15, 0
      %p117 = por %p115, %p116
      %p118 = scmp.ne.s32.totalorder %s110, %s112
      %p119 = scmp.eq.s32.totalorder %s20, 1
      %p120 = por %p118, %p119
      %p121 = scmp.ne.s32.totalorder %s112, %s113
      %p122 = scmp.eq.s32.totalorder %s20, 0
      %p123 = por %p121, %p122
      %p124 = scmp.ne.s32.totalorder %s112, %s113
      %p125 = scmp.eq.s32.totalorder %s21, 1
      %p126 = por %p124, %p125
      %p128 = scmp.ne.s32.totalorder %s113, %s127
      %p129 = scmp.eq.s32.totalorder %s21, 0
      %p130 = por %p128, %p129
      %s132 = sadd.s32 %s131, 1
      %p135 = scmp.eq.s32.totalorder %s15, 1
      %p136 = scmp.ne.s32.totalorder %s131, %s133
      %p137 = scmp.eq.s32.totalorder %s15, 0
      %p138 = por %p136, %p137
      %p139 = scmp.ne.s32.totalorder %s131, %s133
      %p140 = scmp.eq.s32.totalorder %s20, 1
      %p141 = por %p139, %p140
      %p142 = scmp.ne.s32.totalorder %s133, %s134
      %p143 = scmp.eq.s32.totalorder %s20, 0
      %p144 = por %p142, %p143
      %p145 = scmp.ne.s32.totalorder %s133, %s134
      %p146 = scmp.eq.s32.totalorder %s21, 1
      %p147 = por %p145, %p146
      %p149 = scmp.ne.s32.totalorder %s134, %s148
      %p150 = scmp.eq.s32.totalorder %s21, 0
      %p151 = por %p149, %p150
      %s152 = ssub.s32 %s22, %s34
      %p153 = scmp.eq.s32.totalorder %s152, 0
      %s155 = sadd.s32 %s154, 1
      %s156 = scalar_select %p153, %s154, %s155
      %p159 = pneg %p153
      %p160 = scmp.eq.s32.totalorder %s15, 1
      %p161 = por %p159, %p160
      %p162 = scmp.ne.s32.totalorder %s154, %s157
      %p163 = scmp.eq.s32.totalorder %s15, 0
      %p164 = por %p162, %p163
      %p165 = scmp.ne.s32.totalorder %s154, %s157
      %p166 = scmp.eq.s32.totalorder %s20, 1
      %p167 = por %p165, %p166
      %p168 = scmp.ne.s32.totalorder %s157, %s158
      %p169 = scmp.eq.s32.totalorder %s20, 0
      %p170 = por %p168, %p169
      %p171 = scmp.ne.s32.totalorder %s157, %s158
      %p172 = scmp.eq.s32.totalorder %s21, 1
      %p173 = por %p171, %p172
      %p175 = scmp.ne.s32.totalorder %s158, %s174
      %p176 = scmp.eq.s32.totalorder %s21, 0
      %p177 = por %p175, %p176
      %p178 = scmp.le.s32.totalorder 1, %s15
      %p179 = scmp.lt.s32.totalorder %s15, 3
      %p180 = pnand %p178, %p179
      %p181 = pneg %p180
      // Predicated region
      $region9: #{_fcnet_forward_padded.1} parent=5 // pred_check
        _
      $region10: #{_fcnet_forward_padded.1} parent=5 // pred_check_branch
        %183 = sbr.rel (%p180) target = $region12
      $region11: #{_fcnet_forward_padded.1} parent=5 // pred_region
        %s184 = ssub.s32 %s15, 1
        // Predicated region
        $region13: #{_fcnet_forward_padded.1} parent=11 // pred_check
          %p185 = pneg %p102
        $region14: #{_fcnet_forward_padded.1} parent=11 // pred_check_branch
          %187 = sbr.rel (%p185) target = $region16
        $region15: #{_fcnet_forward_padded.1} parent=11 // pred_region
          _
        $region16: #{_fcnet_forward_padded.1} parent=11 // pred_fallthru
          _
        // Predicated region
        $region17: #{_fcnet_forward_padded.1} parent=11 // pred_check
          %p188 = pneg %p123
        $region18: #{_fcnet_forward_padded.1} parent=11 // pred_check_branch
          %190 = sbr.rel (%p188) target = $region20
        $region19: #{_fcnet_forward_padded.1} parent=11 // pred_region
          %192 = vsyncadd [#allocation6], 0
          %s193 = sshll.u32 %s3, 4
          %s194 = int_to_ptr.hbm [resolvable:$true] %s193
          %s195 = sshll.u32 [#allocation5], 4
          %s196 = int_to_ptr.vmem [resolvable:$true] %s195
          %201 = dma.hbm_to_vmem [thread:$0]  %s194, 6144, %s196, [#allocation6], 128, 128, 8
        $region20: #{_fcnet_forward_padded.1} parent=11 // pred_fallthru
          _
        // Predicated region
        $region21: #{_fcnet_forward_padded.1} parent=11 // pred_check
          %p202 = pneg %p144
        $region22: #{_fcnet_forward_padded.1} parent=11 // pred_check_branch
          %204 = sbr.rel (%p202) target = $region24
        $region23: #{_fcnet_forward_padded.1} parent=11 // pred_region
          _
        $region24: #{_fcnet_forward_padded.1} parent=11 // pred_fallthru
          _
      $region12: #{_fcnet_forward_padded.1} parent=5 // pred_fallthru
        _
      %p205 = scmp.lt.s32.totalorder %s15, 2
      // Predicated region
      $region25: #{_fcnet_forward_padded.1} parent=5 // pred_check
        %p206 = pneg %p205
      $region26: #{_fcnet_forward_padded.1} parent=5 // pred_check_branch
        %208 = sbr.rel (%p206) target = $region28
      $region27: #{_fcnet_forward_padded.1} parent=5 // pred_region
        // Predicated region
        $region29: #{_fcnet_forward_padded.1} parent=27 // pred_check
          %p209 = pneg %p49
        $region30: #{_fcnet_forward_padded.1} parent=27 // pred_check_branch
          %211 = sbr.rel (%p209) target = $region32
        $region31: #{_fcnet_forward_padded.1} parent=27 // pred_region
          %s212 = smul.u32 4, %s23
          %p213 = scmp.lt.s32.totalorder %s22, 0
          %s214 = scalar_select %p213, %s22, 0
          %p215 = scmp.lt.s32.totalorder %s212, 7
          %s216 = scalar_select %p215, %s212, 7
          %s217 = smul.addr %s214, 8
          %s218 = sadd.s32 %s216, %s217
          %s219 = smul.addr %s218, 8
          %s220 = scalar_lea.vmem %s0, %s219
          %s221 = smul.u32 4, %s23
        $region32: #{_fcnet_forward_padded.1} parent=27 // pred_fallthru
          _
        // Predicated region
        $region33: #{_fcnet_forward_padded.1} parent=27 // pred_check
          %p222 = pneg %p75
        $region34: #{_fcnet_forward_padded.1} parent=27 // pred_check_branch
          %224 = sbr.rel (%p222) target = $region36
        $region35: #{_fcnet_forward_padded.1} parent=27 // pred_region
          %s225 = sand.u32 %s65, 1
          %s226 = scalar_lea.sflag [#allocation4], %s225
          %s227 = sand.u32 %s65, 1
          %s228 = smul.addr %s227, 512
          %s229 = scalar_lea.vmem [#allocation3], %s228
          %s230 = smul.u32 64, %s23
          %232 = vsyncadd %s226, 0
          %s233 = smul.addr %s230, 8
          %s234 = scalar_lea.hbm %s1, %s233
          %s235 = sshll.u32 %s234, 4
          %s236 = int_to_ptr.hbm [resolvable:$true] %s235
          %s237 = sshll.u32 %s229, 4
          %s238 = int_to_ptr.vmem [resolvable:$true] %s237
          %243 = dma.hbm_to_vmem [thread:$0]  %s236, 8192, %s238, %s226, 128, 128, 8
        $region36: #{_fcnet_forward_padded.1} parent=27 // pred_fallthru
          _
      $region28: #{_fcnet_forward_padded.1} parent=5 // pred_fallthru
        _
      %p244 = scmp.le.s32.totalorder 1, %s15
      %p245 = scmp.lt.s32.totalorder %s15, 3
      %p246 = pnand %p244, %p245
      %p247 = pneg %p246
      // Predicated region
      $region37: #{_fcnet_forward_padded.1} parent=5 // pred_check
        _
      $region38: #{_fcnet_forward_padded.1} parent=5 // pred_check_branch
        %249 = sbr.rel (%p246) target = $region40
      $region39: #{_fcnet_forward_padded.1} parent=5 // pred_region
        %s250 = ssub.s32 %s15, 1
        %s251 = sand.u32 %s68, 1
        %s252 = scalar_lea.sflag [#allocation4], %s251
        %s253 = sand.u32 %s68, 1
        %s254 = smul.addr %s253, 512
        %s255 = scalar_lea.vmem [#allocation3], %s254
        // Predicated region
        $region41: #{_fcnet_forward_padded.1} parent=39 // pred_check
          %p256 = pneg %p81
        $region42: #{_fcnet_forward_padded.1} parent=39 // pred_check_branch
          %258 = sbr.rel (%p256) target = $region44
        $region43: #{_fcnet_forward_padded.1} parent=39 // pred_region
          %260 = dma.done %s252, 8192
        $region44: #{_fcnet_forward_padded.1} parent=39 // pred_fallthru
          _
        // Predicated region
        $region45: #{_fcnet_forward_padded.1} parent=39 // pred_check
          %p261 = pneg %p123
        $region46: #{_fcnet_forward_padded.1} parent=39 // pred_check_branch
          %263 = sbr.rel (%p261) target = $region48
        $region47: #{_fcnet_forward_padded.1} parent=39 // pred_region
          %265 = dma.done [#allocation6], 6144
        $region48: #{_fcnet_forward_padded.1} parent=39 // pred_fallthru
          _
        %s266 = smul.u32 4, %s25
        %p267 = scmp.lt.s32.totalorder %s24, 0
        %s268 = scalar_select %p267, %s24, 0
        %p269 = scmp.lt.s32.totalorder %s266, 7
        %s270 = scalar_select %p269, %s266, 7
        %s271 = smul.addr %s268, 8
        %s272 = sadd.s32 %s270, %s271
        %s273 = smul.addr %s272, 8
        %s274 = scalar_lea.vmem %s0, %s273
        %p275 = pneg %p55
        %p276 = pneg %p52
        %s277 = sand.u32 %s68, 1
        %s278 = scalar_lea.sflag [#allocation4], %s277
        %s279 = sand.u32 %s68, 1
        %s280 = smul.addr %s279, 512
        %s281 = scalar_lea.vmem [#allocation3], %s280
        %p282 = pneg %p81
        %p283 = pneg %p78
        %p284 = pneg %p102
        %p285 = pneg %p99
        %p286 = pneg %p123
        %p287 = pneg %p120
        %p288 = pneg %p144
        %p289 = pneg %p141
        %p290 = pneg %p170
        %p291 = pneg %p167
        %p292 = scmp.lt.s32.totalorder %s24, 0
        %s293 = scalar_select %p292, %s24, 0
        %s294 = smul.addr %s293, 8
        %s295 = scalar_lea.vmem %s5, %s294
        %s296 = smul.u32 4, %s25
        %p297 = scmp.lt.s32.totalorder %s24, 0
        %s298 = scalar_select %p297, %s24, 0
        %p299 = scmp.lt.s32.totalorder %s296, 7
        %s300 = scalar_select %p299, %s296, 7
        %s301 = smul.addr %s298, 8
        %s302 = sadd.s32 %s300, %s301
        %s303 = smul.addr %s302, 8
        %s304 = scalar_lea.vmem %s0, %s303
        %s305 = smul.u32 4, %s25
        %s306 = smul.u32 64, %s25
        %p307 = scmp.lt.s32.totalorder %s24, 0
        %s308 = scalar_select %p307, %s24, 0
        %s309 = smul.addr %s308, 8
        %s310 = scalar_lea.vmem %s5, %s309
        %p311 = scmp.eq.s32.totalorder %s25, 0
        // Predicated region
        $region49: #{_fcnet_forward_padded.1} parent=39 // pred_check
          %p312 = pneg %p311
        $region50: #{_fcnet_forward_padded.1} parent=39 // pred_check_branch
          %314 = sbr.rel (%p312) target = $region52
        $region51: #{_fcnet_forward_padded.1} parent=39 // pred_region
          %315 = vst [vmem:[#allocation2] sm:$0xff] 0.0
        $region52: #{_fcnet_forward_padded.1} parent=39 // pred_fallthru
          _
        %v316 = vld [vmem:[#allocation2] sm:$0xff]
        %v317 = vld [vmem:[%s304] sm:$0xff]
        %v318 = vld [vmem:[%s304 + $0x8] sm:$0xff]
        %v319 = vld [vmem:[%s304 + $0x10] sm:$0xff]
        %v320 = vld [vmem:[%s304 + $0x18] sm:$0xff]
        %v321 = vld [vmem:[%s255] sm:$0xff]
        %v322 = vld [vmem:[%s255 + $0x8] sm:$0xff]
        %v323 = vld [vmem:[%s255 + $0x10] sm:$0xff]
        %v324 = vld [vmem:[%s255 + $0x18] sm:$0xff]
        %v325 = vld [vmem:[%s255 + $0x20] sm:$0xff]
        %v326 = vld [vmem:[%s255 + $0x28] sm:$0xff]
        %v327 = vld [vmem:[%s255 + $0x30] sm:$0xff]
        %v328 = vld [vmem:[%s255 + $0x38] sm:$0xff]
        %v329 = vld [vmem:[%s255 + $0x40] sm:$0xff]
        %v330 = vld [vmem:[%s255 + $0x48] sm:$0xff]
        %v331 = vld [vmem:[%s255 + $0x50] sm:$0xff]
        %v332 = vld [vmem:[%s255 + $0x58] sm:$0xff]
        %v333 = vld [vmem:[%s255 + $0x60] sm:$0xff]
        %v334 = vld [vmem:[%s255 + $0x68] sm:$0xff]
        %v335 = vld [vmem:[%s255 + $0x70] sm:$0xff]
        %v336 = vld [vmem:[%s255 + $0x78] sm:$0xff]
        %v337 = vld [vmem:[%s255 + $0x80] sm:$0xff]
        %v338 = vld [vmem:[%s255 + $0x88] sm:$0xff]
        %v339 = vld [vmem:[%s255 + $0x90] sm:$0xff]
        %v340 = vld [vmem:[%s255 + $0x98] sm:$0xff]
        %v341 = vld [vmem:[%s255 + $0xa0] sm:$0xff]
        %v342 = vld [vmem:[%s255 + $0xa8] sm:$0xff]
        %v343 = vld [vmem:[%s255 + $0xb0] sm:$0xff]
        %v344 = vld [vmem:[%s255 + $0xb8] sm:$0xff]
        %v345 = vld [vmem:[%s255 + $0xc0] sm:$0xff]
        %v346 = vld [vmem:[%s255 + $0xc8] sm:$0xff]
        %v347 = vld [vmem:[%s255 + $0xd0] sm:$0xff]
        %v348 = vld [vmem:[%s255 + $0xd8] sm:$0xff]
        %v349 = vld [vmem:[%s255 + $0xe0] sm:$0xff]
        %v350 = vld [vmem:[%s255 + $0xe8] sm:$0xff]
        %v351 = vld [vmem:[%s255 + $0xf0] sm:$0xff]
        %v352 = vld [vmem:[%s255 + $0xf8] sm:$0xff]
        %v353 = vld [vmem:[%s255 + $0x100] sm:$0xff]
        %v354 = vld [vmem:[%s255 + $0x108] sm:$0xff]
        %v355 = vld [vmem:[%s255 + $0x110] sm:$0xff]
        %v356 = vld [vmem:[%s255 + $0x118] sm:$0xff]
        %v357 = vld [vmem:[%s255 + $0x120] sm:$0xff]
        %v358 = vld [vmem:[%s255 + $0x128] sm:$0xff]
        %v359 = vld [vmem:[%s255 + $0x130] sm:$0xff]
        %v360 = vld [vmem:[%s255 + $0x138] sm:$0xff]
        %v361 = vld [vmem:[%s255 + $0x140] sm:$0xff]
        %v362 = vld [vmem:[%s255 + $0x148] sm:$0xff]
        %v363 = vld [vmem:[%s255 + $0x150] sm:$0xff]
        %v364 = vld [vmem:[%s255 + $0x158] sm:$0xff]
        %v365 = vld [vmem:[%s255 + $0x160] sm:$0xff]
        %v366 = vld [vmem:[%s255 + $0x168] sm:$0xff]
        %v367 = vld [vmem:[%s255 + $0x170] sm:$0xff]
        %v368 = vld [vmem:[%s255 + $0x178] sm:$0xff]
        %v369 = vld [vmem:[%s255 + $0x180] sm:$0xff]
        %v370 = vld [vmem:[%s255 + $0x188] sm:$0xff]
        %v371 = vld [vmem:[%s255 + $0x190] sm:$0xff]
        %v372 = vld [vmem:[%s255 + $0x198] sm:$0xff]
        %v373 = vld [vmem:[%s255 + $0x1a0] sm:$0xff]
        %v374 = vld [vmem:[%s255 + $0x1a8] sm:$0xff]
        %v375 = vld [vmem:[%s255 + $0x1b0] sm:$0xff]
        %v376 = vld [vmem:[%s255 + $0x1b8] sm:$0xff]
        %v377 = vld [vmem:[%s255 + $0x1c0] sm:$0xff]
        %v378 = vld [vmem:[%s255 + $0x1c8] sm:$0xff]
        %v379 = vld [vmem:[%s255 + $0x1d0] sm:$0xff]
        %v380 = vld [vmem:[%s255 + $0x1d8] sm:$0xff]
        %v381 = vld [vmem:[%s255 + $0x1e0] sm:$0xff]
        %v382 = vld [vmem:[%s255 + $0x1e8] sm:$0xff]
        %v383 = vld [vmem:[%s255 + $0x1f0] sm:$0xff]
        %v384 = vld [vmem:[%s255 + $0x1f8] sm:$0xff]
        %385 = vmatpush.msra.mxu0 %v336
        %386 = vmatpush.msra.mxu0 %v335
        %387 = vmatpush.msra.mxu0 %v334
        %388 = vmatpush.msra.mxu0 %v333
        %389 = vmatpush.msra.mxu0 %v332
        %390 = vmatpush.msra.mxu0 %v331
        %391 = vmatpush.msra.mxu0 %v330
        %392 = vmatpush.msra.mxu0 %v329
        %393 = vmatpush.msra.mxu0 %v328
        %394 = vmatpush.msra.mxu0 %v327
        %395 = vmatpush.msra.mxu0 %v326
        %396 = vmatpush.msra.mxu0 %v325
        %397 = vmatpush.msra.mxu0 %v324
        %398 = vmatpush.msra.mxu0 %v323
        %399 = vmatpush.msra.mxu0 %v322
        %400 = vmatpush.msra.mxu0 %v321
        %401 = vmatmul.f32.gmra.mxu0 %v317
        %v402 = vpop.f32.mrf.mxu0
        %v403 = vadd.f32 0.0, %v402
        %404 = vdwg.mxu0
        %405 = vmatpush.msra.mxu0 %v352
        %406 = vmatpush.msra.mxu0 %v351
        %407 = vmatpush.msra.mxu0 %v350
        %408 = vmatpush.msra.mxu0 %v349
        %409 = vmatpush.msra.mxu0 %v348
        %410 = vmatpush.msra.mxu0 %v347
        %411 = vmatpush.msra.mxu0 %v346
        %412 = vmatpush.msra.mxu0 %v345
        %413 = vmatpush.msra.mxu0 %v344
        %414 = vmatpush.msra.mxu0 %v343
        %415 = vmatpush.msra.mxu0 %v342
        %416 = vmatpush.msra.mxu0 %v341
        %417 = vmatpush.msra.mxu0 %v340
        %418 = vmatpush.msra.mxu0 %v339
        %419 = vmatpush.msra.mxu0 %v338
        %420 = vmatpush.msra.mxu0 %v337
        %421 = vmatmul.f32.gmra.mxu0 %v318
        %v422 = vpop.f32.mrf.mxu0
        %v423 = vadd.f32 %v403, %v422
        %424 = vdwg.mxu0
        %425 = vmatpush.msra.mxu0 %v368
        %426 = vmatpush.msra.mxu0 %v367
        %427 = vmatpush.msra.mxu0 %v366
        %428 = vmatpush.msra.mxu0 %v365
        %429 = vmatpush.msra.mxu0 %v364
        %430 = vmatpush.msra.mxu0 %v363
        %431 = vmatpush.msra.mxu0 %v362
        %432 = vmatpush.msra.mxu0 %v361
        %433 = vmatpush.msra.mxu0 %v360
        %434 = vmatpush.msra.mxu0 %v359
        %435 = vmatpush.msra.mxu0 %v358
        %436 = vmatpush.msra.mxu0 %v357
        %437 = vmatpush.msra.mxu0 %v356
        %438 = vmatpush.msra.mxu0 %v355
        %439 = vmatpush.msra.mxu0 %v354
        %440 = vmatpush.msra.mxu0 %v353
        %441 = vmatmul.f32.gmra.mxu0 %v319
        %v442 = vpop.f32.mrf.mxu0
        %v443 = vadd.f32 %v423, %v442
        %444 = vdwg.mxu0
        %445 = vmatpush.msra.mxu0 %v384
        %446 = vmatpush.msra.mxu0 %v383
        %447 = vmatpush.msra.mxu0 %v382
        %448 = vmatpush.msra.mxu0 %v381
        %449 = vmatpush.msra.mxu0 %v380
        %450 = vmatpush.msra.mxu0 %v379
        %451 = vmatpush.msra.mxu0 %v378
        %452 = vmatpush.msra.mxu0 %v377
        %453 = vmatpush.msra.mxu0 %v376
        %454 = vmatpush.msra.mxu0 %v375
        %455 = vmatpush.msra.mxu0 %v374
        %456 = vmatpush.msra.mxu0 %v373
        %457 = vmatpush.msra.mxu0 %v372
        %458 = vmatpush.msra.mxu0 %v371
        %459 = vmatpush.msra.mxu0 %v370
        %460 = vmatpush.msra.mxu0 %v369
        %461 = vmatmul.f32.gmra.mxu0 %v320
        %v462 = vpop.f32.mrf.mxu0
        %v463 = vadd.f32 %v443, %v462
        %464 = vdwg.mxu0
        %v465 = vadd.f32 %v316, %v463
        %466 = vst [vmem:[#allocation2] sm:$0xff] %v465
        %p467 = scmp.eq.s32.totalorder %s25, 1
        // Predicated region
        $region53: #{_fcnet_forward_padded.1} parent=39 // pred_check
          %p468 = pneg %p467
        $region54: #{_fcnet_forward_padded.1} parent=39 // pred_check_branch
          %470 = sbr.rel (%p468) target = $region56
        $region55: #{_fcnet_forward_padded.1} parent=39 // pred_region
          %v471 = vld [vmem:[#allocation2] sm:$0xff]
          %v472 = vld [vmem:[%s2] sm:$0x1]
          %v474 = vperm.slane %v472, 0
          %v476 = vadd.f32 %v471, %v474
          %v477 = vmax.f32 %v476, 0.0
          %v478 = vld [vmem:[#allocation5] sm:$0xff]
          %v479 = vld [vmem:[#allocation5 + $0x8] sm:$0xff]
          %v480 = vld [vmem:[#allocation5 + $0x10] sm:$0xff]
          %v481 = vld [vmem:[#allocation5 + $0x18] sm:$0xff]
          %v482 = vld [vmem:[#allocation5 + $0x20] sm:$0xff]
          %v483 = vld [vmem:[#allocation5 + $0x28] sm:$0xff]
          %v484 = vld [vmem:[#allocation5 + $0x30] sm:$0xff]
          %v485 = vld [vmem:[#allocation5 + $0x38] sm:$0xff]
          %v486 = vld [vmem:[#allocation5 + $0x40] sm:$0xff]
          %v487 = vld [vmem:[#allocation5 + $0x48] sm:$0xff]
          %v488 = vld [vmem:[#allocation5 + $0x50] sm:$0xff]
          %v489 = vld [vmem:[#allocation5 + $0x58] sm:$0xff]
          %v490 = vld [vmem:[#allocation5 + $0x60] sm:$0xff]
          %v491 = vld [vmem:[#allocation5 + $0x68] sm:$0xff]
          %v492 = vld [vmem:[#allocation5 + $0x70] sm:$0xff]
          %v493 = vld [vmem:[#allocation5 + $0x78] sm:$0xff]
          %v494 = vld [vmem:[%s4] sm:$0x1]
          %v496 = vperm.slane %v494, 0
          %498 = vmatpush.msra.mxu0 %v493
          %499 = vmatpush.msra.mxu0 %v492
          %500 = vmatpush.msra.mxu0 %v491
          %501 = vmatpush.msra.mxu0 %v490
          %502 = vmatpush.msra.mxu0 %v489
          %503 = vmatpush.msra.mxu0 %v488
          %504 = vmatpush.msra.mxu0 %v487
          %505 = vmatpush.msra.mxu0 %v486
          %506 = vmatpush.msra.mxu0 %v485
          %507 = vmatpush.msra.mxu0 %v484
          %508 = vmatpush.msra.mxu0 %v483
          %509 = vmatpush.msra.mxu0 %v482
          %510 = vmatpush.msra.mxu0 %v481
          %511 = vmatpush.msra.mxu0 %v480
          %512 = vmatpush.msra.mxu0 %v479
          %513 = vmatpush.msra.mxu0 %v478
          %514 = vmatmul.f32.gmra.mxu0 %v477
          %v515 = vpop.f32.mrf.mxu0
          %v516 = vadd.f32 %v496, %v515
          %517 = vdwg.mxu0
          %v518 = vmax.f32 %v516, 0.0
          %s519 = scalar_lea.vmem [#allocation5], 128
          %v520 = vld [vmem:[%s519] sm:$0xff]
          %v521 = vld [vmem:[%s519 + $0x8] sm:$0xff]
          %v522 = vld [vmem:[%s519 + $0x10] sm:$0xff]
          %v523 = vld [vmem:[%s519 + $0x18] sm:$0xff]
          %v524 = vld [vmem:[%s519 + $0x20] sm:$0xff]
          %v525 = vld [vmem:[%s519 + $0x28] sm:$0xff]
          %v526 = vld [vmem:[%s519 + $0x30] sm:$0xff]
          %v527 = vld [vmem:[%s519 + $0x38] sm:$0xff]
          %v528 = vld [vmem:[%s519 + $0x40] sm:$0xff]
          %v529 = vld [vmem:[%s519 + $0x48] sm:$0xff]
          %v530 = vld [vmem:[%s519 + $0x50] sm:$0xff]
          %v531 = vld [vmem:[%s519 + $0x58] sm:$0xff]
          %v532 = vld [vmem:[%s519 + $0x60] sm:$0xff]
          %v533 = vld [vmem:[%s519 + $0x68] sm:$0xff]
          %v534 = vld [vmem:[%s519 + $0x70] sm:$0xff]
          %v535 = vld [vmem:[%s519 + $0x78] sm:$0xff]
          %s536 = scalar_lea.vmem %s4, 1
          %v537 = vld [vmem:[%s536] sm:$0x1]
          %v539 = vperm.slane %v537, 0
          %541 = vmatpush.msra.mxu0 %v535
          %542 = vmatpush.msra.mxu0 %v534
          %543 = vmatpush.msra.mxu0 %v533
          %544 = vmatpush.msra.mxu0 %v532
          %545 = vmatpush.msra.mxu0 %v531
          %546 = vmatpush.msra.mxu0 %v530
          %547 = vmatpush.msra.mxu0 %v529
          %548 = vmatpush.msra.mxu0 %v528
          %549 = vmatpush.msra.mxu0 %v527
          %550 = vmatpush.msra.mxu0 %v526
          %551 = vmatpush.msra.mxu0 %v525
          %552 = vmatpush.msra.mxu0 %v524
          %553 = vmatpush.msra.mxu0 %v523
          %554 = vmatpush.msra.mxu0 %v522
          %555 = vmatpush.msra.mxu0 %v521
          %556 = vmatpush.msra.mxu0 %v520
          %557 = vmatmul.f32.gmra.mxu0 %v518
          %v558 = vpop.f32.mrf.mxu0
          %v559 = vadd.f32 %v539, %v558
          %560 = vdwg.mxu0
          %v561 = vmax.f32 %v559, 0.0
          %s562 = scalar_lea.vmem [#allocation5], 256
          %v563 = vld [vmem:[%s562] sm:$0xff]
          %v564 = vld [vmem:[%s562 + $0x8] sm:$0xff]
          %v565 = vld [vmem:[%s562 + $0x10] sm:$0xff]
          %v566 = vld [vmem:[%s562 + $0x18] sm:$0xff]
          %v567 = vld [vmem:[%s562 + $0x20] sm:$0xff]
          %v568 = vld [vmem:[%s562 + $0x28] sm:$0xff]
          %v569 = vld [vmem:[%s562 + $0x30] sm:$0xff]
          %v570 = vld [vmem:[%s562 + $0x38] sm:$0xff]
          %v571 = vld [vmem:[%s562 + $0x40] sm:$0xff]
          %v572 = vld [vmem:[%s562 + $0x48] sm:$0xff]
          %v573 = vld [vmem:[%s562 + $0x50] sm:$0xff]
          %v574 = vld [vmem:[%s562 + $0x58] sm:$0xff]
          %v575 = vld [vmem:[%s562 + $0x60] sm:$0xff]
          %v576 = vld [vmem:[%s562 + $0x68] sm:$0xff]
          %v577 = vld [vmem:[%s562 + $0x70] sm:$0xff]
          %v578 = vld [vmem:[%s562 + $0x78] sm:$0xff]
          %s579 = scalar_lea.vmem %s4, 2
          %v580 = vld [vmem:[%s579] sm:$0x1]
          %v582 = vperm.slane %v580, 0
          %584 = vmatpush.msra.mxu0 %v578
          %585 = vmatpush.msra.mxu0 %v577
          %586 = vmatpush.msra.mxu0 %v576
          %587 = vmatpush.msra.mxu0 %v575
          %588 = vmatpush.msra.mxu0 %v574
          %589 = vmatpush.msra.mxu0 %v573
          %590 = vmatpush.msra.mxu0 %v572
          %591 = vmatpush.msra.mxu0 %v571
          %592 = vmatpush.msra.mxu0 %v570
          %593 = vmatpush.msra.mxu0 %v569
          %594 = vmatpush.msra.mxu0 %v568
          %595 = vmatpush.msra.mxu0 %v567
          %596 = vmatpush.msra.mxu0 %v566
          %597 = vmatpush.msra.mxu0 %v565
          %598 = vmatpush.msra.mxu0 %v564
          %599 = vmatpush.msra.mxu0 %v563
          %600 = vmatmul.f32.gmra.mxu0 %v561
          %v601 = vpop.f32.mrf.mxu0
          %v602 = vadd.f32 %v582, %v601
          %603 = vdwg.mxu0
          %v604 = vmax.f32 %v602, 0.0
          %605 = vst [vmem:[%s310] sm:$0xff] %v604
        $region56: #{_fcnet_forward_padded.1} parent=39 // pred_fallthru
          _
        %p606 = scmp.lt.s32.totalorder %s24, 0
        %s607 = scalar_select %p606, %s24, 0
        %s608 = smul.addr %s607, 8
        %s609 = scalar_lea.vmem %s5, %s608
        // Predicated region
        $region57: #{_fcnet_forward_padded.1} parent=39 // pred_check
          %p610 = pneg %p167
        $region58: #{_fcnet_forward_padded.1} parent=39 // pred_check_branch
          %612 = sbr.rel (%p610) target = $region60
        $region59: #{_fcnet_forward_padded.1} parent=39 // pred_region
          _
        $region60: #{_fcnet_forward_padded.1} parent=39 // pred_fallthru
          _
        // Predicated region
        $region61: #{_fcnet_forward_padded.1} parent=39 // pred_check
          %p613 = pneg %p167
        $region62: #{_fcnet_forward_padded.1} parent=39 // pred_check_branch
          %615 = sbr.rel (%p613) target = $region64
        $region63: #{_fcnet_forward_padded.1} parent=39 // pred_region
          %p616 = scmp.lt.s32.totalorder %s24, 0
          %s617 = scalar_select %p616, %s24, 0
          %s618 = smul.addr %s617, 8
          %s619 = scalar_lea.vmem %s5, %s618
        $region64: #{_fcnet_forward_padded.1} parent=39 // pred_fallthru
          _
      $region40: #{_fcnet_forward_padded.1} parent=5 // pred_fallthru
        _
      %p620 = scmp.le.s32.totalorder 2, %s15
      // Predicated region
      $region65: #{_fcnet_forward_padded.1} parent=5 // pred_check
        %p621 = pneg %p620
      $region66: #{_fcnet_forward_padded.1} parent=5 // pred_check_branch
        %623 = sbr.rel (%p621) target = $region68
      $region67: #{_fcnet_forward_padded.1} parent=5 // pred_region
        %s624 = ssub.s32 %s15, 2
      $region68: #{_fcnet_forward_padded.1} parent=5 // pred_fallthru
        _
    $region6: #{_fcnet_forward_padded.1} parent=1 // loop_footer
      %s19 = sadd.s32 1, %s15
    $region7: #{_fcnet_forward_padded.1} parent=1 // loop_footer_branch
      %14 = sbr.rel target = $region3
    $region8: #{_fcnet_forward_padded.1} parent=1 // loop_exit
      _
    %625 = vsyncpa [#allocation4], 1
    %s626 = scalar_lea.sflag [#allocation4], 1
    %627 = vsyncpa %s626, 1
    %628 = vsyncpa [#allocation6], 1

</llo_original>
